<compile_context>
chip_gen: v5e
topology: v5e:2x2
jax: 0.10.0
libtpu: 0.0.40
codegen_flags: <defaults>
</compile_context>

<pallas_src>
import functools

import jax
import jax.numpy as jnp
from jax import lax
from jax.experimental import pallas as pl
from jax.experimental.pallas import tpu as pltpu


def _round_up(n, m):
    return (n + m - 1) // m * m


ENT_CHUNK = 1024  # entity slab processed per in-kernel loop iteration


# ------------------------- one-time table packing ---------------------------

def _pack_table(table):
    """(E, K) f32 -> (NC, 3*KP, CH) bf16.

    Transposed (K on sublanes, entities on lanes), zero-padded (KP multiple of
    8, entity dim multiple of 128 / of ENT_CHUNK for big tables), split into 3
    exact bf16 planes (hi, mid, lo) stacked along sublanes, and pre-chunked
    along the entity axis so the kernel can loop over bounded-size slabs.
    Done ONCE at model construction (hoisted out of the per-call path).
    """
    e, k = table.shape
    kp = _round_up(k, 8)
    if e <= ENT_CHUNK:
        ep = _round_up(e, 128)
        ch = ep
    else:
        ep = _round_up(e, ENT_CHUNK)
        ch = ENT_CHUNK
    nc = ep // ch

    tt = jnp.zeros((kp, ep), jnp.float32).at[:k, :e].set(
        table.T.astype(jnp.float32))
    hi = tt.astype(jnp.bfloat16)
    r1 = tt - hi.astype(jnp.float32)
    mid = r1.astype(jnp.bfloat16)
    lo = (r1 - mid.astype(jnp.float32)).astype(jnp.bfloat16)
    planes = jnp.concatenate([hi, mid, lo], axis=0)              # (3KP, EP)
    packed = planes.reshape(3 * kp, nc, ch).transpose(1, 0, 2)   # (NC, 3KP, CH)
    return packed


# ------------------------------ Pallas kernel -------------------------------

def _mf_fused_kernel(wt_ref, ht_ref, uidx_ref, iidx_ref, o_ref):
    """Fused embedding gather + per-row dot, batch on the lane axis.

    wt_ref:   (NCu, 3*KP, CHu) bf16 -- packed W planes, whole table in VMEM
    ht_ref:   (NCi, 3*KP, CHi) bf16 -- packed H planes, whole table in VMEM
    uidx_ref: (1, TB) i32           -- user indices for this batch tile (lanes)
    iidx_ref: (1, TB) i32           -- item indices for this batch tile (lanes)
    o_ref:    (1, TB) f32           -- per-row dot products (lane-dense store)
    """
    tb = uidx_ref.shape[1]

    def gather(tab_ref, idx):
        nc, threekp, ch = tab_ref.shape
        kp = threekp // 3

        def body(c, acc):
            # One-hot selection of this entity slab: rows iota (sublanes)
            # compared against the index lanes; exact in bf16 (values 0/1).
            rows = lax.broadcasted_iota(jnp.int32, (ch, tb), 0) + c * ch
            onehot = (rows == idx).astype(jnp.bfloat16)                 # (CH, TB)
            # Single bf16 MXU matmul selects all 3 planes at once (f32 acc).
            r = jnp.dot(tab_ref[c], onehot,
                        preferred_element_type=jnp.float32)             # (3KP, TB)
            # Reconstruct f32 values: hi + mid + lo (selection is linear).
            return acc + (r[:kp] + r[kp:2 * kp] + r[2 * kp:])

        acc0 = jnp.zeros((kp, tb), jnp.float32)
        if nc == 1:
            return body(0, acc0)
        return lax.fori_loop(0, nc, body, acc0, unroll=nc <= 8)

    uidx = uidx_ref[...]
    iidx = iidx_ref[...]
    u_t = gather(wt_ref, uidx)        # (KP, TB) f32
    v_t = gather(ht_ref, iidx)        # (KP, TB) f32
    # Row dot product on the VPU: elementwise mul + tiny sublane reduce,
    # written as an unmasked lane-dense (1, TB) store.
    o_ref[...] = jnp.sum(u_t * v_t, axis=0, keepdims=True)


def _mf_dot_fused(wt_packed, ht_packed, user_idx, item_idx, *, tile_b=1024):
    """out[i] = sum_k W[user_idx[i], k] * H[item_idx[i], k], fused in Pallas."""
    b = user_idx.shape[0]
    ncu, threekp, chu = wt_packed.shape
    nci, _, chi = ht_packed.shape
    kp = threekp // 3

    # Lane-dense batch tile (multiple of 128). Using ceil(B/2) as the cap
    # guarantees grid >= 2 whenever B > 128, so the "parallel" axis shards
    # across v7x's two TensorCores for small/medium batches.
    tile_b = max(128, _round_up(tile_b, 128))
    tb = min(tile_b, max(128, _round_up(-(-b // 2), 128)))
    bp = _round_up(b, tb)

    # Pad ONLY the tiny int32 index vectors; padded slots point at row 0 and
    # their outputs are sliced off after the kernel.
    uid = jnp.zeros((1, bp), jnp.int32).at[0, :b].set(user_idx.astype(jnp.int32))
    iid = jnp.zeros((1, bp), jnp.int32).at[0, :b].set(item_idx.astype(jnp.int32))

    grid = (bp // tb,)

    # Explicit VMEM budget: single-buffered resident tables + double-buffered
    # idx/out tiles + in-kernel one-hot / accumulator intermediates + margin.
    table_bytes = (wt_packed.size + ht_packed.size) * 2
    tile_bytes = 2 * (2 * tb * 4) + 2 * (tb * 4)
    interm_bytes = (chu + chi) * tb * 8 + 8 * threekp * tb * 4
    vmem_limit = int(min(table_bytes + tile_bytes + interm_bytes + (4 << 20),
                         96 << 20))

    flops = grid[0] * 2 * threekp * (ncu * chu + nci * chi) * tb + 2 * bp * kp
    bytes_accessed = table_bytes + 2 * bp * 4 + bp * 4

    out = pl.pallas_call(
        _mf_fused_kernel,
        out_shape=jax.ShapeDtypeStruct((1, bp), jnp.float32),
        grid_spec=pltpu.PrefetchScalarGridSpec(
            num_scalar_prefetch=0,
            grid=grid,
            in_specs=[
                # Whole packed tables resident in VMEM, single-buffered
                # (constant across the grid -> no pipelining needed).
                pl.BlockSpec(memory_space=pltpu.MemorySpace.VMEM),
                pl.BlockSpec(memory_space=pltpu.MemorySpace.VMEM),
                pl.BlockSpec((1, tb), lambda i: (0, i)),    # user idx tile
                pl.BlockSpec((1, tb), lambda i: (0, i)),    # item idx tile
            ],
            out_specs=pl.BlockSpec((1, tb), lambda i: (0, i)),
        ),
        compiler_params=pltpu.CompilerParams(
            dimension_semantics=("parallel",),
            vmem_limit_bytes=vmem_limit),
        cost_estimate=pl.CostEstimate(flops=flops, transcendentals=0,
                                      bytes_accessed=bytes_accessed),
    )(wt_packed, ht_packed, uid, iid)
    return out[0, :b]
    # TODO(synk): for embedding tables too large for VMEM residency, switch to
    # memory_space=pl.ANY + scalar-prefetched indices + manual DMA row-gather
    # (the one-hot path is O(table_size x batch) and loses past ~a few k rows).


# ---------------------------- Model (JAX wrapper) ---------------------------

@functools.partial(jax.jit, static_argnames=("is_training",))
def _mf_mcdropout_forward(W, H, wt_packed, ht_packed, x, is_training=False):
    user_idx = jnp.clip(x[:, 0].astype(jnp.int32), 0, W.shape[0] - 1)
    item_idx = jnp.clip(x[:, 1].astype(jnp.int32), 0, H.shape[0] - 1)
    if is_training:
        # Training path must materialize the embeddings anyway; skip the Pallas
        # kernel and compute the dot as a cheap fused elementwise JAX op.
        u_emb = jnp.take(W, user_idx, axis=0)
        v_emb = jnp.take(H, item_idx, axis=0)
        out = jnp.sum(u_emb * v_emb, axis=1)
        return out, u_emb, v_emb
    out = _mf_dot_fused(wt_packed, ht_packed, user_idx, item_idx)  # Pallas hot path
    return out


class MFMcdropoutPallas:
    """JAX/Pallas port of MF_McdropoutModel's forward pass."""

    def __init__(self, num_users, num_items, embedding_k=4, pdrop=0.5,
                 key=None):
        self.num_users = num_users
        self.num_items = num_items
        self.embedding_k = embedding_k
        self.pdrop = pdrop
        if key is None:
            key = jax.random.PRNGKey(0)
        kw, kh = jax.random.split(key)
        # torch.nn.Embedding default init ~ N(0, 1); deterministic here.
        self.W = jax.random.normal(kw, (num_users, embedding_k), jnp.float32)
        self.H = jax.random.normal(kh, (num_items, embedding_k), jnp.float32)
        # Hoisted out of the per-call path: transposed/padded/bf16-split/
        # pre-chunked tables, computed once at construction.
        self.Wp = _pack_table(self.W)
        self.Hp = _pack_table(self.H)
        # TODO(synk): McDropout MC-sampling (sample_predict), sigmoid/BCE loss
        # utilities are not part of the deterministic forward pass and are not
        # implemented here.

    def forward(self, x, is_training=False):
        return _mf_mcdropout_forward(self.W, self.H, self.Wp, self.Hp, x,
                                     is_training=is_training)


# ----------------------------------- main ------------------------------------

if __name__ == "__main__":
    num_users, num_items, embedding_k = 32, 48, 4
    batch = 10

    key = jax.random.PRNGKey(0)
    k_model, k_u, k_i = jax.random.split(key, 3)

    model = MFMcdropoutPallas(num_users, num_items, embedding_k, key=k_model)

    user_ids = jax.random.randint(k_u, (batch,), 0, num_users, dtype=jnp.int32)
    item_ids = jax.random.randint(k_i, (batch,), 0, num_items, dtype=jnp.int32)
    x = jnp.stack([user_ids, item_ids], axis=1)           # (B, 2) int32

    # Inference path (Pallas kernel).
    out = model.forward(x, is_training=False)
    out = jax.block_until_ready(out)

    # Pure-JAX reference check of the forward semantics.
    u_ref = model.W[x[:, 0]]
    v_ref = model.H[x[:, 1]]
    ref = jnp.sum(u_ref * v_ref, axis=1)
    assert out.shape == (batch,)
    assert jnp.allclose(out, ref, atol=1e-5, rtol=1e-5)

    # Training path (plain JAX; also returns the gathered embeddings).
    out_tr, u_emb, v_emb = model.forward(x, is_training=True)
    jax.block_until_ready(out_tr)
    assert jnp.allclose(out_tr, ref, atol=1e-5, rtol=1e-5)
    assert jnp.allclose(u_emb, u_ref, atol=1e-6)
    assert jnp.allclose(v_emb, v_ref, atol=1e-6)

    print("KERNEL_OK")
</pallas_src>

<mosaic_0001>
module attributes {stable_mosaic.version = 11 : i64} {
  func.func @_mf_fused_kernel(%arg0: i32, %arg1: memref<1x24x128xbf16, #tpu.memory_space<vmem>>, %arg2: memref<1x24x128xbf16, #tpu.memory_space<vmem>>, %arg3: memref<1x128xi32, #tpu.memory_space<vmem>>, %arg4: memref<1x128xi32, #tpu.memory_space<vmem>>, %arg5: memref<1x128xf32, #tpu.memory_space<vmem>>) attributes {dimension_semantics = [#tpu.dimension_semantics<parallel>], iteration_bounds = array<i64: 1>, scalar_prefetch = 0 : i64, scratch_operands = 0 : i64, tpu.core_type = #tpu.core_type<tc>, window_params = [{pipeline_mode = #tpu.pipeline_mode<synchronous>, transform_indices = @transform_0, window_bounds = array<i64: 1, 24, 128>}, {pipeline_mode = #tpu.pipeline_mode<synchronous>, transform_indices = @transform_1, window_bounds = array<i64: 1, 24, 128>}, {transform_indices = @transform_2, window_bounds = array<i64: 1, 128>}, {transform_indices = @transform_3, window_bounds = array<i64: 1, 128>}, {transform_indices = @transform_4, window_bounds = array<i64: 1, 128>}]} {
    %c0 = arith.constant 0 : index
    %c0_0 = arith.constant 0 : index
    %0 = vector.load %arg3[%c0, %c0_0] : memref<1x128xi32, #tpu.memory_space<vmem>>, vector<1x128xi32>
    %c0_1 = arith.constant 0 : index
    %c0_2 = arith.constant 0 : index
    %1 = vector.load %arg4[%c0_1, %c0_2] : memref<1x128xi32, #tpu.memory_space<vmem>>, vector<1x128xi32>
    %cst = arith.constant 0.000000e+00 : f32
    %2 = vector.broadcast %cst : f32 to vector<8x128xf32>
    %3 = tpu.iota {dimensions = array<i32: 0>} : vector<128x128xi32>
    %c0_i32 = arith.constant 0 : i32
    %4 = vector.broadcast %c0_i32 : i32 to vector<128x128xi32>
    %5 = arith.addi %3, %4 : vector<128x128xi32>
    %6 = vector.broadcast %0 : vector<1x128xi32> to vector<128x128xi32>
    %7 = arith.cmpi eq, %5, %6 : vector<128x128xi32>
    %8 = arith.extui %7 : vector<128x128xi1> to vector<128x128xi32>
    %9 = arith.sitofp %8 : vector<128x128xi32> to vector<128x128xf32>
    %10 = arith.truncf %9 : vector<128x128xf32> to vector<128x128xbf16>
    %c0_3 = arith.constant 0 : index
    %c0_4 = arith.constant 0 : index
    %c0_5 = arith.constant 0 : index
    %11 = vector.load %arg1[%c0_3, %c0_4, %c0_5] : memref<1x24x128xbf16, #tpu.memory_space<vmem>>, vector<1x24x128xbf16>
    %12 = vector.shape_cast %11 : vector<1x24x128xbf16> to vector<24x128xbf16>
    %cst_6 = arith.constant dense<0.000000e+00> : vector<24x128xf32>
    %13 = tpu.matmul %12, %10, %cst_6 {dimension_numbers = #tpu.dot_dimension_numbers<[1], [0], [0], [1], [0, 0, 1, 1], [], []>} : vector<24x128xbf16>, vector<128x128xbf16>, vector<24x128xf32> -> vector<24x128xf32>
    %14 = vector.extract_strided_slice %13 {offsets = [0, 0], sizes = [8, 128], strides = [1, 1]} : vector<24x128xf32> to vector<8x128xf32>
    %15 = vector.extract_strided_slice %13 {offsets = [8, 0], sizes = [8, 128], strides = [1, 1]} : vector<24x128xf32> to vector<8x128xf32>
    %16 = arith.addf %14, %15 : vector<8x128xf32>
    %17 = vector.extract_strided_slice %13 {offsets = [16, 0], sizes = [8, 128], strides = [1, 1]} : vector<24x128xf32> to vector<8x128xf32>
    %18 = arith.addf %16, %17 : vector<8x128xf32>
    %19 = arith.addf %2, %18 : vector<8x128xf32>
    %cst_7 = arith.constant 0.000000e+00 : f32
    %20 = vector.broadcast %cst_7 : f32 to vector<8x128xf32>
    %21 = tpu.iota {dimensions = array<i32: 0>} : vector<128x128xi32>
    %c0_i32_8 = arith.constant 0 : i32
    %22 = vector.broadcast %c0_i32_8 : i32 to vector<128x128xi32>
    %23 = arith.addi %21, %22 : vector<128x128xi32>
    %24 = vector.broadcast %1 : vector<1x128xi32> to vector<128x128xi32>
    %25 = arith.cmpi eq, %23, %24 : vector<128x128xi32>
    %26 = arith.extui %25 : vector<128x128xi1> to vector<128x128xi32>
    %27 = arith.sitofp %26 : vector<128x128xi32> to vector<128x128xf32>
    %28 = arith.truncf %27 : vector<128x128xf32> to vector<128x128xbf16>
    %c0_9 = arith.constant 0 : index
    %c0_10 = arith.constant 0 : index
    %c0_11 = arith.constant 0 : index
    %29 = vector.load %arg2[%c0_9, %c0_10, %c0_11] : memref<1x24x128xbf16, #tpu.memory_space<vmem>>, vector<1x24x128xbf16>
    %30 = vector.shape_cast %29 : vector<1x24x128xbf16> to vector<24x128xbf16>
    %cst_12 = arith.constant dense<0.000000e+00> : vector<24x128xf32>
    %31 = tpu.matmul %30, %28, %cst_12 {dimension_numbers = #tpu.dot_dimension_numbers<[1], [0], [0], [1], [0, 0, 1, 1], [], []>} : vector<24x128xbf16>, vector<128x128xbf16>, vector<24x128xf32> -> vector<24x128xf32>
    %32 = vector.extract_strided_slice %31 {offsets = [0, 0], sizes = [8, 128], strides = [1, 1]} : vector<24x128xf32> to vector<8x128xf32>
    %33 = vector.extract_strided_slice %31 {offsets = [8, 0], sizes = [8, 128], strides = [1, 1]} : vector<24x128xf32> to vector<8x128xf32>
    %34 = arith.addf %32, %33 : vector<8x128xf32>
    %35 = vector.extract_strided_slice %31 {offsets = [16, 0], sizes = [8, 128], strides = [1, 1]} : vector<24x128xf32> to vector<8x128xf32>
    %36 = arith.addf %34, %35 : vector<8x128xf32>
    %37 = arith.addf %20, %36 : vector<8x128xf32>
    %38 = arith.mulf %19, %37 : vector<8x128xf32>
    %cst_13 = arith.constant dense<0.000000e+00> : vector<128xf32>
    %39 = vector.multi_reduction <add>, %38, %cst_13 [0] : vector<8x128xf32> to vector<128xf32>
    %40 = vector.shape_cast %39 : vector<128xf32> to vector<1x128xf32>
    %c0_14 = arith.constant 0 : index
    %c0_15 = arith.constant 0 : index
    %41 = vector.load %arg5[%c0_14, %c0_15] : memref<1x128xf32, #tpu.memory_space<vmem>>, vector<1x128xf32>
    tpu.vector_store %arg5[%c0_14, %c0_15], %40 {strides = array<i32>} : memref<1x128xf32, #tpu.memory_space<vmem>>, vector<1x128xf32>,
    return
  }
  func.func @transform_0(%arg0: i32) -> (i32, i32, i32) {
    %c0_i32 = arith.constant 0 : i32
    %c0_i32_0 = arith.constant 0 : i32
    %c0_i32_1 = arith.constant 0 : i32
    %c0_i32_2 = arith.constant 0 : i32
    return %c0_i32, %c0_i32_0, %c0_i32_1 : i32, i32, i32
  }
  func.func @transform_1(%arg0: i32) -> (i32, i32, i32) {
    %c0_i32 = arith.constant 0 : i32
    %c0_i32_0 = arith.constant 0 : i32
    %c0_i32_1 = arith.constant 0 : i32
    %c0_i32_2 = arith.constant 0 : i32
    return %c0_i32, %c0_i32_0, %c0_i32_1 : i32, i32, i32
  }
  func.func @transform_2(%arg0: i32) -> (i32, i32) {
    %c0_i32 = arith.constant 0 : i32
    %c0_i32_0 = arith.constant 0 : i32
    return %c0_i32, %arg0 : i32, i32
  }
  func.func @transform_3(%arg0: i32) -> (i32, i32) {
    %c0_i32 = arith.constant 0 : i32
    %c0_i32_0 = arith.constant 0 : i32
    return %c0_i32, %arg0 : i32, i32
  }
  func.func @transform_4(%arg0: i32) -> (i32, i32) {
    %c0_i32 = arith.constant 0 : i32
    %c0_i32_0 = arith.constant 0 : i32
    return %c0_i32, %arg0 : i32, i32
  }
}

</mosaic_0001>

<llo_original>
// kernel: _mf_mcdropout_forward.1
$region0: #{_mf_mcdropout_forward.1}
  #allocation0 [shape = 'u32[]', space=smem, size = 0x4, offset = 0x4, fixed_abs, tag = 'smem constant byte address 0x4 - core index']
  #allocation1 [shape = 'u32[72,128]{1,0:T(1,128)}', space=vmem, size = 0x9000, scoped, tag = 'internal scratch']
  %s0 = inlined_call_operand.vmem [shape: bf16[1,24,128], index: 0, kind: input, shape index: {}]
  %s1 = inlined_call_operand.hbm [shape: bf16[1,24,128], index: 1, kind: input, shape index: {}]
  %s2 = inlined_call_operand.vmem [shape: s32[1,128], index: 2, kind: input, shape index: {}]
  %s3 = inlined_call_operand.vmem [shape: s32[1,128], index: 3, kind: input, shape index: {}]
  %s4 = inlined_call_operand.vmem [shape: f32[1,128], index: 4, kind: output, shape index: {}]
  %s5 = sld [smem:[#allocation0]]
  $region30: #{_mf_mcdropout_forward.1} parent=0
    _
  %s7 = ssub.s32 1, %s5
  %s8 = scalar_select 0, %s7, %s5
  $region1: #{_mf_mcdropout_forward.1} parent=0
    #allocation2 [shape = 'u8[6144]{0}', space=vmem, size = 0x1800, scoped, tag = 'input window, operand 1, single buffered']
    #allocation3 [shape = 's32[1]{0}', space=sflag, size = 0x4, scoped, tag = 'scoped memory for _mf_mcdropout_forward.1']
    %9 = vsyncpa [#allocation3], 0
    // Predicated region
    $region2: #{_mf_mcdropout_forward.1} parent=1 // pred_check
      _
    $region3: #{_mf_mcdropout_forward.1} parent=1 // pred_check_branch
      %11 = sbr.rel (0) target = $region5
    $region4: #{_mf_mcdropout_forward.1} parent=1 // pred_region
      _
    $region5: #{_mf_mcdropout_forward.1} parent=1 // pred_fallthru
      _
    // Predicated region
    $region6: #{_mf_mcdropout_forward.1} parent=1 // pred_check
      _
    $region7: #{_mf_mcdropout_forward.1} parent=1 // pred_check_branch
      %13 = sbr.rel (0) target = $region9
    $region8: #{_mf_mcdropout_forward.1} parent=1 // pred_region
      %15 = vsyncadd [#allocation3], 0
      %s16 = sshll.u32 %s1, 4
      %s17 = int_to_ptr.hbm [resolvable:$true] %s16
      %s18 = sshll.u32 [#allocation2], 4
      %s19 = int_to_ptr.vmem [resolvable:$true] %s18
      %24 = dma.hbm_to_vmem [thread:$0]  %s17, 192, %s19, [#allocation3], 64, 64, 4
    $region9: #{_mf_mcdropout_forward.1} parent=1 // pred_fallthru
      _
    // Predicated region
    $region10: #{_mf_mcdropout_forward.1} parent=1 // pred_check
      _
    $region11: #{_mf_mcdropout_forward.1} parent=1 // pred_check_branch
      %26 = sbr.rel (0) target = $region13
    $region12: #{_mf_mcdropout_forward.1} parent=1 // pred_region
      _
    $region13: #{_mf_mcdropout_forward.1} parent=1 // pred_fallthru
      _
    // Predicated region
    $region14: #{_mf_mcdropout_forward.1} parent=1 // pred_check
      _
    $region15: #{_mf_mcdropout_forward.1} parent=1 // pred_check_branch
      %28 = sbr.rel (0) target = $region17
    $region16: #{_mf_mcdropout_forward.1} parent=1 // pred_region
      _
    $region17: #{_mf_mcdropout_forward.1} parent=1 // pred_fallthru
      _
    // Predicated region
    $region18: #{_mf_mcdropout_forward.1} parent=1 // pred_check
      _
    $region19: #{_mf_mcdropout_forward.1} parent=1 // pred_check_branch
      %30 = sbr.rel (0) target = $region21
    $region20: #{_mf_mcdropout_forward.1} parent=1 // pred_region
      %32 = dma.done [#allocation3], 192
    $region21: #{_mf_mcdropout_forward.1} parent=1 // pred_fallthru
      _
    %v33 = vld [vmem:[%s2] sm:$0x1]
    %v34 = vld [vmem:[%s3] sm:$0x1]
    %v35 = vlaneseq
    %v36 = vshrl.u32 %v35, 7
    %v37 = vadd.s32 %v36, 8
    %v38 = vadd.s32 %v36, 16
    %v39 = vadd.s32 %v36, 24
    %v40 = vadd.s32 %v36, 32
    %v41 = vadd.s32 %v36, 40
    %v42 = vadd.s32 %v36, 48
    %v43 = vadd.s32 %v36, 56
    %v44 = vadd.s32 %v36, 64
    %v45 = vadd.s32 %v36, 72
    %v46 = vadd.s32 %v36, 80
    %v47 = vadd.s32 %v36, 88
    %v48 = vadd.s32 %v36, 96
    %v49 = vadd.s32 %v36, 104
    %v50 = vadd.s32 %v36, 112
    %v51 = vadd.s32 %v36, 120
    %v52 = vperm.slane %v33, 0
    %vm53 = vcmp.eq.s32.totalorder %v36, %v52
    %vm54 = vcmp.eq.s32.totalorder %v37, %v52
    %vm55 = vcmp.eq.s32.totalorder %v38, %v52
    %vm56 = vcmp.eq.s32.totalorder %v39, %v52
    %vm57 = vcmp.eq.s32.totalorder %v40, %v52
    %vm58 = vcmp.eq.s32.totalorder %v41, %v52
    %vm59 = vcmp.eq.s32.totalorder %v42, %v52
    %vm60 = vcmp.eq.s32.totalorder %v43, %v52
    %vm61 = vcmp.eq.s32.totalorder %v44, %v52
    %vm62 = vcmp.eq.s32.totalorder %v45, %v52
    %vm63 = vcmp.eq.s32.totalorder %v46, %v52
    %vm64 = vcmp.eq.s32.totalorder %v47, %v52
    %vm65 = vcmp.eq.s32.totalorder %v48, %v52
    %vm66 = vcmp.eq.s32.totalorder %v49, %v52
    %vm67 = vcmp.eq.s32.totalorder %v50, %v52
    %vm68 = vcmp.eq.s32.totalorder %v51, %v52
    %v69 = vsel %vm53, 1, 0
    %v70 = vsel %vm54, 1, 0
    %v71 = vsel %vm55, 1, 0
    %v72 = vsel %vm56, 1, 0
    %v73 = vsel %vm57, 1, 0
    %v74 = vsel %vm58, 1, 0
    %v75 = vsel %vm59, 1, 0
    %v76 = vsel %vm60, 1, 0
    %v77 = vsel %vm61, 1, 0
    %v78 = vsel %vm62, 1, 0
    %v79 = vsel %vm63, 1, 0
    %v80 = vsel %vm64, 1, 0
    %v81 = vsel %vm65, 1, 0
    %v82 = vsel %vm66, 1, 0
    %v83 = vsel %vm67, 1, 0
    %v84 = vsel %vm68, 1, 0
    %v85 = vcvt.s32.f32 %v69
    %v86 = vcvt.s32.f32 %v70
    %v87 = vcvt.s32.f32 %v71
    %v88 = vcvt.s32.f32 %v72
    %v89 = vcvt.s32.f32 %v73
    %v90 = vcvt.s32.f32 %v74
    %v91 = vcvt.s32.f32 %v75
    %v92 = vcvt.s32.f32 %v76
    %v93 = vcvt.s32.f32 %v77
    %v94 = vcvt.s32.f32 %v78
    %v95 = vcvt.s32.f32 %v79
    %v96 = vcvt.s32.f32 %v80
    %v97 = vcvt.s32.f32 %v81
    %v98 = vcvt.s32.f32 %v82
    %v99 = vcvt.s32.f32 %v83
    %v100 = vcvt.s32.f32 %v84
    %v101 = vpack.c.bf16 %v86, %v85
    %v102 = vpack.c.bf16 %v88, %v87
    %v103 = vpack.c.bf16 %v90, %v89
    %v104 = vpack.c.bf16 %v92, %v91
    %v105 = vpack.c.bf16 %v94, %v93
    %v106 = vpack.c.bf16 %v96, %v95
    %v107 = vpack.c.bf16 %v98, %v97
    %v108 = vpack.c.bf16 %v100, %v99
    %v109 = vld [vmem:[%s0] sm:$0xf]
    %v110 = vld [vmem:[%s0 + $0x4] sm:$0xf]
    %v111 = vld [vmem:[%s0 + $0x8] sm:$0xf]
    %v115 = vunpack.c.l.b16 %v109
    %v116 = vunpack.c.l.b16 %v110
    %v117 = vunpack.c.l.b16 %v111
    %v118 = vpack.c.b16 %v116, %v115
    %v119 = vpack.c.b16 %v117, %v117
    %122 = vmatpush.bf16.msra.mxu0 %v108
    %123 = vmatpush.bf16.msra.mxu0 %v107
    %124 = vmatpush.bf16.msra.mxu0 %v106
    %125 = vmatpush.bf16.msra.mxu0 %v105
    %126 = vmatpush.bf16.msra.mxu0 %v104
    %127 = vmatpush.bf16.msra.mxu0 %v103
    %128 = vmatpush.bf16.msra.mxu0 %v102
    %129 = vmatpush.bf16.msra.mxu0 %v101
    %130 = vmatmul.bf16.gmra.mxu0 %v118
    %v131 = vpop.f32.mrf.mxu0
    %v132 = vadd.f32 0.0, %v131
    %v133 = vpop.f32.mrf.mxu0
    %v134 = vadd.f32 0.0, %v133
    %135 = vmatmul.bf16.gmra.mxu0 %v119
    %v136 = vpop.f32.mrf.mxu0
    %v137 = vadd.f32 0.0, %v136
    %v138 = vpop.f32.mrf.mxu0
    %139 = vdwg.mxu0
    %v140 = vadd.f32 %v132, %v134
    %v141 = vadd.f32 %v140, %v137
    %v142 = vadd.f32 %v141, 0.0
    %v143 = vperm.slane %v34, 0
    %vm144 = vcmp.eq.s32.totalorder %v36, %v143
    %vm145 = vcmp.eq.s32.totalorder %v37, %v143
    %vm146 = vcmp.eq.s32.totalorder %v38, %v143
    %vm147 = vcmp.eq.s32.totalorder %v39, %v143
    %vm148 = vcmp.eq.s32.totalorder %v40, %v143
    %vm149 = vcmp.eq.s32.totalorder %v41, %v143
    %vm150 = vcmp.eq.s32.totalorder %v42, %v143
    %vm151 = vcmp.eq.s32.totalorder %v43, %v143
    %vm152 = vcmp.eq.s32.totalorder %v44, %v143
    %vm153 = vcmp.eq.s32.totalorder %v45, %v143
    %vm154 = vcmp.eq.s32.totalorder %v46, %v143
    %vm155 = vcmp.eq.s32.totalorder %v47, %v143
    %vm156 = vcmp.eq.s32.totalorder %v48, %v143
    %vm157 = vcmp.eq.s32.totalorder %v49, %v143
    %vm158 = vcmp.eq.s32.totalorder %v50, %v143
    %vm159 = vcmp.eq.s32.totalorder %v51, %v143
    %v160 = vsel %vm144, 1, 0
    %v161 = vsel %vm145, 1, 0
    %v162 = vsel %vm146, 1, 0
    %v163 = vsel %vm147, 1, 0
    %v164 = vsel %vm148, 1, 0
    %v165 = vsel %vm149, 1, 0
    %v166 = vsel %vm150, 1, 0
    %v167 = vsel %vm151, 1, 0
    %v168 = vsel %vm152, 1, 0
    %v169 = vsel %vm153, 1, 0
    %v170 = vsel %vm154, 1, 0
    %v171 = vsel %vm155, 1, 0
    %v172 = vsel %vm156, 1, 0
    %v173 = vsel %vm157, 1, 0
    %v174 = vsel %vm158, 1, 0
    %v175 = vsel %vm159, 1, 0
    %v176 = vcvt.s32.f32 %v160
    %v177 = vcvt.s32.f32 %v161
    %v178 = vcvt.s32.f32 %v162
    %v179 = vcvt.s32.f32 %v163
    %v180 = vcvt.s32.f32 %v164
    %v181 = vcvt.s32.f32 %v165
    %v182 = vcvt.s32.f32 %v166
    %v183 = vcvt.s32.f32 %v167
    %v184 = vcvt.s32.f32 %v168
    %v185 = vcvt.s32.f32 %v169
    %v186 = vcvt.s32.f32 %v170
    %v187 = vcvt.s32.f32 %v171
    %v188 = vcvt.s32.f32 %v172
    %v189 = vcvt.s32.f32 %v173
    %v190 = vcvt.s32.f32 %v174
    %v191 = vcvt.s32.f32 %v175
    %v192 = vpack.c.bf16 %v177, %v176
    %v193 = vpack.c.bf16 %v179, %v178
    %v194 = vpack.c.bf16 %v181, %v180
    %v195 = vpack.c.bf16 %v183, %v182
    %v196 = vpack.c.bf16 %v185, %v184
    %v197 = vpack.c.bf16 %v187, %v186
    %v198 = vpack.c.bf16 %v189, %v188
    %v199 = vpack.c.bf16 %v191, %v190
    %v200 = vld [vmem:[#allocation2] sm:$0xf]
    %v201 = vld [vmem:[#allocation2 + $0x4] sm:$0xf]
    %v202 = vld [vmem:[#allocation2 + $0x8] sm:$0xf]
    %v206 = vunpack.c.l.b16 %v200
    %v207 = vunpack.c.l.b16 %v201
    %v208 = vunpack.c.l.b16 %v202
    %v209 = vpack.c.b16 %v207, %v206
    %v210 = vpack.c.b16 %v208, %v208
    %213 = vmatpush.bf16.msra.mxu0 %v199
    %214 = vmatpush.bf16.msra.mxu0 %v198
    %215 = vmatpush.bf16.msra.mxu0 %v197
    %216 = vmatpush.bf16.msra.mxu0 %v196
    %217 = vmatpush.bf16.msra.mxu0 %v195
    %218 = vmatpush.bf16.msra.mxu0 %v194
    %219 = vmatpush.bf16.msra.mxu0 %v193
    %220 = vmatpush.bf16.msra.mxu0 %v192
    %221 = vmatmul.bf16.gmra.mxu0 %v209
    %v222 = vpop.f32.mrf.mxu0
    %v223 = vadd.f32 0.0, %v222
    %v224 = vpop.f32.mrf.mxu0
    %v225 = vadd.f32 0.0, %v224
    %226 = vmatmul.bf16.gmra.mxu0 %v210
    %v227 = vpop.f32.mrf.mxu0
    %v228 = vadd.f32 0.0, %v227
    %v229 = vpop.f32.mrf.mxu0
    %230 = vdwg.mxu0
    %v231 = vadd.f32 %v223, %v225
    %v232 = vadd.f32 %v231, %v228
    %v233 = vadd.f32 %v232, 0.0
    %v234 = vmul.f32 %v142, %v233
    %v235 = vrot.slane %v234, 4
    %v236 = vadd.f32 %v234, %v235
    %v237 = vrot.slane %v236, 2
    %v238 = vadd.f32 %v236, %v237
    %v239 = vrot.slane %v238, 1
    %v240 = vadd.f32 %v238, %v239
    %241 = vst [vmem:[%s4] sm:$0x1] %v240
    // Predicated region
    $region22: #{_mf_mcdropout_forward.1} parent=1 // pred_check
      _
    $region23: #{_mf_mcdropout_forward.1} parent=1 // pred_check_branch
      %243 = sbr.rel (0) target = $region25
    $region24: #{_mf_mcdropout_forward.1} parent=1 // pred_region
      _
    $region25: #{_mf_mcdropout_forward.1} parent=1 // pred_fallthru
      _
    // Predicated region
    $region26: #{_mf_mcdropout_forward.1} parent=1 // pred_check
      _
    $region27: #{_mf_mcdropout_forward.1} parent=1 // pred_check_branch
      %245 = sbr.rel (0) target = $region29
    $region28: #{_mf_mcdropout_forward.1} parent=1 // pred_region
      _
    $region29: #{_mf_mcdropout_forward.1} parent=1 // pred_fallthru
      _
    %246 = vsyncpa [#allocation3], 1

</llo_original>
